<compile_context>
chip_gen: v5e
topology: v5e:2x2
jax: 0.10.0
libtpu: 0.0.40
codegen_flags: <defaults>
</compile_context>

<pallas_src>
import functools
import math

import numpy as np

import jax
import jax.numpy as jnp
from jax import lax
from jax.experimental import pallas as pl
from jax.experimental.pallas import tpu as pltpu

EPS = 1e-5
_VMEM_LIMIT_BYTES = 64 * 1024 * 1024        # <= physical VMEM on v5e/v6e/v7x
_TARGET_BLOCK_BYTES = 4 * 1024 * 1024       # per-block target; 2x(in+out) ~ 16 MiB
_MAX_TILE_ROWS = 8192


def _round_up(a, b):
    return (a + b - 1) // b * b


# ----------------------------- kernels ---------------------------------------


def _gn_rows_kernel(x_ref, gamma_ref, beta_ref, mavg_ref, bones_ref, o_ref, *, eps):
    # x_ref:     (T, L)   L = k * C lanes (lane-dense packed rows)
    # gamma/beta:(1, L)
    # mavg_ref:  (L, kG)  mavg[l, g] = 1/cg if lane l belongs to group g else 0
    # bones_ref: (kG, L)  one-hot broadcast-back matrix
    x = x_ref[...].astype(jnp.float32)
    gamma = gamma_ref[...].astype(jnp.float32)
    beta = beta_ref[...].astype(jnp.float32)
    mavg = mavg_ref[...]
    bones = bones_ref[...]
    hp = lax.Precision.HIGHEST  # full-f32 MXU passes; the matmuls are tiny vs. HBM traffic

    # Group means via MXU, broadcast back via one-hot MXU matmul (no XLU reduce, no concat).
    mean_g = jnp.dot(x, mavg, preferred_element_type=jnp.float32, precision=hp)   # (T, kG)
    d = x - jnp.dot(mean_g, bones, preferred_element_type=jnp.float32, precision=hp)
    var_g = jnp.dot(d * d, mavg, preferred_element_type=jnp.float32, precision=hp)  # (T, kG)
    rstd = jnp.dot(lax.rsqrt(var_g + eps), bones,
                   preferred_element_type=jnp.float32, precision=hp)               # (T, L)

    o_ref[...] = (d * rstd * gamma + beta).astype(o_ref.dtype)


def _gn_spatial_kernel(x_ref, gamma_ref, beta_ref, o_ref, *, eps):
    # x_ref: (1, 1, cg, S) -- one (sample, group) block; stats fully contained in the block.
    # gamma/beta: (1, cg, 1)
    x = x_ref[0, 0].astype(jnp.float32)          # (cg, S)
    gamma = gamma_ref[0].astype(jnp.float32)     # (cg, 1)
    beta = beta_ref[0].astype(jnp.float32)       # (cg, 1)

    mean = jnp.mean(x)
    d = x - mean
    var = jnp.mean(d * d)
    y = d * lax.rsqrt(var + eps)
    o_ref[0, 0] = (y * gamma + beta).astype(o_ref.dtype)


# ----------------------------- wrappers ---------------------------------------


def _gn_rows(x2d, gamma, beta, num_groups, eps=EPS):
    n, c = x2d.shape
    cg = c // num_groups

    # Lane-dense packing factor: pack k rows per 128-lane packed row when possible.
    if c % 128 == 0 or 128 % c != 0:
        k = 1    # TODO(synk): channels that neither divide nor are divided by 128 stay lane-sparse.
    else:
        k = 128 // c
    lane = k * c
    kg = k * num_groups

    # Row tile: multiple of 8, sized so one block is ~4 MiB (mem-bound => big tiles).
    max_rows = max(8, min(_MAX_TILE_ROWS, (_TARGET_BLOCK_BYTES // (lane * 4)) // 8 * 8))
    n_packed_min = pl.cdiv(n, k)
    tile_rows = min(_round_up(n_packed_min, 8), max_rows)
    n_packed = _round_up(n_packed_min, tile_rows)
    n_pad = n_packed * k

    if n_pad != n:
        # Rows are independent -> zero-pad and slice after (keeps the large-tile pipeline).
        x2d = jnp.pad(x2d, ((0, n_pad - n), (0, 0)))
    xp = x2d.reshape(n_packed, lane)

    gamma_p = jnp.tile(gamma, k).reshape(1, lane)
    beta_p = jnp.tile(beta, k).reshape(1, lane)

    # Static group-reduction / broadcast-back matrices (lane l -> group l // cg).
    grp = np.arange(lane) // cg
    mavg_np = (grp[:, None] == np.arange(kg)[None, :]).astype(np.float32) / float(cg)
    bones_np = (grp[None, :] == np.arange(kg)[:, None]).astype(np.float32)
    mavg = jnp.asarray(mavg_np)
    bones = jnp.asarray(bones_np)

    kernel = functools.partial(_gn_rows_kernel, eps=eps)
    yp = pl.pallas_call(
        kernel,
        out_shape=jax.ShapeDtypeStruct((n_packed, lane), x2d.dtype),
        grid_spec=pltpu.PrefetchScalarGridSpec(
            num_scalar_prefetch=0,
            grid=(n_packed // tile_rows,),
            in_specs=[
                pl.BlockSpec((tile_rows, lane), lambda i: (i, 0)),
                pl.BlockSpec((1, lane), lambda i: (0, 0)),       # constant -> resident
                pl.BlockSpec((1, lane), lambda i: (0, 0)),
                pl.BlockSpec((lane, kg), lambda i: (0, 0)),
                pl.BlockSpec((kg, lane), lambda i: (0, 0)),
            ],
            out_specs=pl.BlockSpec((tile_rows, lane), lambda i: (i, 0)),
        ),
        compiler_params=pltpu.CompilerParams(
            dimension_semantics=("parallel",),
            vmem_limit_bytes=_VMEM_LIMIT_BYTES,
        ),
    )(xp, gamma_p, beta_p, mavg, bones)

    y = yp.reshape(n_pad, c)
    if n_pad != n:
        y = y[:n]
    return y


def _gn_spatial(x, gamma, beta, num_groups, eps=EPS):
    n, c = x.shape[0], x.shape[1]
    s = math.prod(x.shape[2:])
    cg = c // num_groups

    # Block per (sample, group): cuts per-step VMEM by num_groups x and gives two
    # parallel grid axes (megacore sharding on v7x).
    # TODO(synk): for very large feature maps (cg*S*4B per block still too big), also tile S
    #             with a two-pass sum/sumsq accumulation over an "arbitrary" S axis.
    x4 = x.reshape(n, num_groups, cg, s)
    g3 = gamma.reshape(num_groups, cg, 1)
    b3 = beta.reshape(num_groups, cg, 1)

    kernel = functools.partial(_gn_spatial_kernel, eps=eps)
    y = pl.pallas_call(
        kernel,
        out_shape=jax.ShapeDtypeStruct(x4.shape, x.dtype),
        grid_spec=pltpu.PrefetchScalarGridSpec(
            num_scalar_prefetch=0,
            grid=(n, num_groups),
            in_specs=[
                pl.BlockSpec((1, 1, cg, s), lambda i, g: (i, g, 0, 0)),
                pl.BlockSpec((1, cg, 1), lambda i, g: (g, 0, 0)),
                pl.BlockSpec((1, cg, 1), lambda i, g: (g, 0, 0)),
            ],
            out_specs=pl.BlockSpec((1, 1, cg, s), lambda i, g: (i, g, 0, 0)),
        ),
        compiler_params=pltpu.CompilerParams(
            dimension_semantics=("parallel", "parallel"),
            vmem_limit_bytes=_VMEM_LIMIT_BYTES,
        ),
    )(x4, g3, b3)
    return y.reshape(x.shape)


class MyGroupNorm:
    """JAX/Pallas port of flare's mygroupnorm (forward pass)."""

    def __init__(self, num_groups, num_channels, dtype=jnp.float32):
        assert num_channels % num_groups == 0
        self.num_groups = num_groups
        self.num_channels = num_channels
        # nn.GroupNorm default affine init: weight = 1, bias = 0.
        self.gamma = jnp.ones((num_channels,), dtype)
        self.beta = jnp.zeros((num_channels,), dtype)

    def __call__(self, x):
        if x.ndim == 3:
            b, v, c = x.shape
            y = _gn_rows(x.reshape(b * v, c), self.gamma, self.beta, self.num_groups)
            return y.reshape(b, v, c)
        elif x.ndim == 2:
            return _gn_rows(x, self.gamma, self.beta, self.num_groups)
        else:
            # NCHW (or N, C, *spatial): flatten spatial dims into the lane axis.
            return _gn_spatial(x, self.gamma, self.beta, self.num_groups)


# ----------------------------- reference (pure JAX) ----------------------------


def _gn_reference(x, gamma, beta, num_groups):
    if x.ndim == 3:
        b, v, c = x.shape
        return _gn_reference(x.reshape(b * v, c), gamma, beta, num_groups).reshape(b, v, c)
    n, c = x.shape[0], x.shape[1]
    rest = x.shape[2:]
    xg = x.reshape(n, num_groups, -1).astype(jnp.float32)
    mean = jnp.mean(xg, axis=-1, keepdims=True)
    var = jnp.mean((xg - mean) ** 2, axis=-1, keepdims=True)
    y = ((xg - mean) * lax.rsqrt(var + EPS)).reshape((n, c) + rest)
    gshape = (1, c) + (1,) * len(rest)
    return (y * gamma.reshape(gshape) + beta.reshape(gshape)).astype(x.dtype)


# ----------------------------- main --------------------------------------------

if __name__ == "__main__":
    key = jax.random.PRNGKey(0)
    k1, k2, k3, k4, k5 = jax.random.split(key, 5)

    num_groups, num_channels = 4, 32
    mod = MyGroupNorm(num_groups, num_channels)
    # Deterministic non-trivial affine params to exercise the scale/shift path.
    mod.gamma = jax.random.normal(k3, (num_channels,), jnp.float32) * 0.1 + 1.0
    mod.beta = jax.random.normal(k4, (num_channels,), jnp.float32) * 0.1

    # 3-D path (the module's main branch): (b, v, c) -> reshape -> GroupNorm -> reshape.
    x3 = jax.random.normal(k1, (2, 8, num_channels), jnp.float32)
    y3 = jax.block_until_ready(mod(x3))
    ref3 = _gn_reference(x3, mod.gamma, mod.beta, num_groups)
    assert y3.shape == x3.shape
    assert jnp.max(jnp.abs(y3 - ref3)) < 1e-4

    # 3-D path with a row count that exercises the padding / packing path (N = 15).
    x5 = jax.random.normal(k5, (3, 5, num_channels), jnp.float32)
    y5 = jax.block_until_ready(mod(x5))
    ref5 = _gn_reference(x5, mod.gamma, mod.beta, num_groups)
    assert y5.shape == x5.shape
    assert jnp.max(jnp.abs(y5 - ref5)) < 1e-4

    # 4-D NCHW path (else branch): per-(sample, group) stats over channels x spatial.
    x4 = jax.random.normal(k2, (2, num_channels, 4, 4), jnp.float32)
    y4 = jax.block_until_ready(mod(x4))
    ref4 = _gn_reference(x4, mod.gamma, mod.beta, num_groups)
    assert y4.shape == x4.shape
    assert jnp.max(jnp.abs(y4 - ref4)) < 1e-4

    print("KERNEL_OK")
</pallas_src>

<mosaic_0001>
module attributes {stable_mosaic.version = 11 : i64} {
  func.func @_gn_rows_kernel(%arg0: i32, %arg1: memref<8x128xf32, #tpu.memory_space<vmem>>, %arg2: memref<1x128xf32, #tpu.memory_space<vmem>>, %arg3: memref<1x128xf32, #tpu.memory_space<vmem>>, %arg4: memref<128x16xf32, #tpu.memory_space<vmem>>, %arg5: memref<16x128xf32, #tpu.memory_space<vmem>>, %arg6: memref<8x128xf32, #tpu.memory_space<vmem>>) attributes {dimension_semantics = [#tpu.dimension_semantics<parallel>], iteration_bounds = array<i64: 1>, scalar_prefetch = 0 : i64, scratch_operands = 0 : i64, tpu.core_type = #tpu.core_type<tc>, window_params = [{transform_indices = @transform_0, window_bounds = array<i64: 8, 128>}, {pipeline_mode = #tpu.pipeline_mode<synchronous>, transform_indices = @transform_1, window_bounds = array<i64: 1, 128>}, {pipeline_mode = #tpu.pipeline_mode<synchronous>, transform_indices = @transform_2, window_bounds = array<i64: 1, 128>}, {pipeline_mode = #tpu.pipeline_mode<synchronous>, transform_indices = @transform_3, window_bounds = array<i64: 128, 16>}, {pipeline_mode = #tpu.pipeline_mode<synchronous>, transform_indices = @transform_4, window_bounds = array<i64: 16, 128>}, {transform_indices = @transform_5, window_bounds = array<i64: 8, 128>}]} {
    %c0 = arith.constant 0 : index
    %c0_0 = arith.constant 0 : index
    %0 = vector.load %arg1[%c0, %c0_0] : memref<8x128xf32, #tpu.memory_space<vmem>>, vector<8x128xf32>
    %c0_1 = arith.constant 0 : index
    %c0_2 = arith.constant 0 : index
    %1 = vector.load %arg2[%c0_1, %c0_2] : memref<1x128xf32, #tpu.memory_space<vmem>>, vector<1x128xf32>
    %c0_3 = arith.constant 0 : index
    %c0_4 = arith.constant 0 : index
    %2 = vector.load %arg3[%c0_3, %c0_4] : memref<1x128xf32, #tpu.memory_space<vmem>>, vector<1x128xf32>
    %c0_5 = arith.constant 0 : index
    %c0_6 = arith.constant 0 : index
    %3 = vector.load %arg4[%c0_5, %c0_6] : memref<128x16xf32, #tpu.memory_space<vmem>>, vector<128x16xf32>
    %c0_7 = arith.constant 0 : index
    %c0_8 = arith.constant 0 : index
    %4 = vector.load %arg5[%c0_7, %c0_8] : memref<16x128xf32, #tpu.memory_space<vmem>>, vector<16x128xf32>
    %cst = arith.constant dense<0.000000e+00> : vector<8x16xf32>
    %5 = tpu.matmul %0, %3, %cst {dimension_numbers = #tpu.dot_dimension_numbers<[1], [0], [0], [1], [0, 0, 1, 1], [], []>, precision = #tpu.contract_precision<fp32>} : vector<8x128xf32>, vector<128x16xf32>, vector<8x16xf32> -> vector<8x16xf32>
    %cst_9 = arith.constant dense<0.000000e+00> : vector<8x128xf32>
    %6 = tpu.matmul %5, %4, %cst_9 {dimension_numbers = #tpu.dot_dimension_numbers<[1], [0], [0], [1], [0, 0, 1, 1], [], []>, precision = #tpu.contract_precision<fp32>} : vector<8x16xf32>, vector<16x128xf32>, vector<8x128xf32> -> vector<8x128xf32>
    %7 = arith.subf %0, %6 : vector<8x128xf32>
    %8 = arith.mulf %7, %7 : vector<8x128xf32>
    %cst_10 = arith.constant dense<0.000000e+00> : vector<8x16xf32>
    %9 = tpu.matmul %8, %3, %cst_10 {dimension_numbers = #tpu.dot_dimension_numbers<[1], [0], [0], [1], [0, 0, 1, 1], [], []>, precision = #tpu.contract_precision<fp32>} : vector<8x128xf32>, vector<128x16xf32>, vector<8x16xf32> -> vector<8x16xf32>
    %cst_11 = arith.constant 9.99999974E-6 : f32
    %10 = vector.broadcast %cst_11 : f32 to vector<8x16xf32>
    %11 = arith.addf %9, %10 : vector<8x16xf32>
    %12 = math.rsqrt %11 : vector<8x16xf32>
    %cst_12 = arith.constant dense<0.000000e+00> : vector<8x128xf32>
    %13 = tpu.matmul %12, %4, %cst_12 {dimension_numbers = #tpu.dot_dimension_numbers<[1], [0], [0], [1], [0, 0, 1, 1], [], []>, precision = #tpu.contract_precision<fp32>} : vector<8x16xf32>, vector<16x128xf32>, vector<8x128xf32> -> vector<8x128xf32>
    %14 = arith.mulf %7, %13 : vector<8x128xf32>
    %15 = vector.broadcast %1 : vector<1x128xf32> to vector<8x128xf32>
    %16 = arith.mulf %14, %15 : vector<8x128xf32>
    %17 = vector.broadcast %2 : vector<1x128xf32> to vector<8x128xf32>
    %18 = arith.addf %16, %17 : vector<8x128xf32>
    %c0_13 = arith.constant 0 : index
    %c0_14 = arith.constant 0 : index
    %19 = vector.load %arg6[%c0_13, %c0_14] : memref<8x128xf32, #tpu.memory_space<vmem>>, vector<8x128xf32>
    tpu.vector_store %arg6[%c0_13, %c0_14], %18 {strides = array<i32>} : memref<8x128xf32, #tpu.memory_space<vmem>>, vector<8x128xf32>,
    return
  }
  func.func @transform_0(%arg0: i32) -> (i32, i32) {
    %c0_i32 = arith.constant 0 : i32
    %c0_i32_0 = arith.constant 0 : i32
    return %arg0, %c0_i32 : i32, i32
  }
  func.func @transform_1(%arg0: i32) -> (i32, i32) {
    %c0_i32 = arith.constant 0 : i32
    %c0_i32_0 = arith.constant 0 : i32
    %c0_i32_1 = arith.constant 0 : i32
    return %c0_i32, %c0_i32_0 : i32, i32
  }
  func.func @transform_2(%arg0: i32) -> (i32, i32) {
    %c0_i32 = arith.constant 0 : i32
    %c0_i32_0 = arith.constant 0 : i32
    %c0_i32_1 = arith.constant 0 : i32
    return %c0_i32, %c0_i32_0 : i32, i32
  }
  func.func @transform_3(%arg0: i32) -> (i32, i32) {
    %c0_i32 = arith.constant 0 : i32
    %c0_i32_0 = arith.constant 0 : i32
    %c0_i32_1 = arith.constant 0 : i32
    return %c0_i32, %c0_i32_0 : i32, i32
  }
  func.func @transform_4(%arg0: i32) -> (i32, i32) {
    %c0_i32 = arith.constant 0 : i32
    %c0_i32_0 = arith.constant 0 : i32
    %c0_i32_1 = arith.constant 0 : i32
    return %c0_i32, %c0_i32_0 : i32, i32
  }
  func.func @transform_5(%arg0: i32) -> (i32, i32) {
    %c0_i32 = arith.constant 0 : i32
    %c0_i32_0 = arith.constant 0 : i32
    return %arg0, %c0_i32 : i32, i32
  }
}

</mosaic_0001>

<llo_original>
// kernel: tpu_custom_call.1
$region0: #{tpu_custom_call.1}
  #allocation0 [shape = 'u32[]', space=smem, size = 0x4, offset = 0x4, fixed_abs, tag = 'smem constant byte address 0x4 - core index']
  #allocation1 [shape = 'u32[72,128]{1,0:T(1,128)}', space=vmem, size = 0x9000, scoped, tag = 'internal scratch']
  %s0 = inlined_call_operand.vmem [shape: f32[8,128], index: 0, kind: input, shape index: {}]
  %s1 = inlined_call_operand.vmem [shape: f32[1,128], index: 1, kind: input, shape index: {}]
  %s2 = inlined_call_operand.vmem [shape: f32[1,128], index: 2, kind: input, shape index: {}]
  %s3 = inlined_call_operand.vmem [shape: f32[128,16], index: 3, kind: input, shape index: {}]
  %s4 = inlined_call_operand.vmem [shape: f32[16,128], index: 4, kind: input, shape index: {}]
  %s5 = inlined_call_operand.hbm [shape: f32[8,128], index: 5, kind: output, shape index: {}]
  %s6 = sld [smem:[#allocation0]]
  $region30: #{tpu_custom_call.1} parent=0
    _
  %s8 = ssub.s32 1, %s6
  %s9 = scalar_select 0, %s8, %s6
  $region1: #{tpu_custom_call.1} parent=0
    #allocation2 [shape = 'u8[4096]{0}', space=vmem, size = 0x1000, scoped, tag = 'output window, operand 0, single buffered']
    #allocation3 [shape = 's32[1]{0}', space=sflag, size = 0x4, scoped, tag = 'scoped memory for tpu_custom_call.1']
    %10 = vsyncpa [#allocation3], 0
    // Predicated region
    $region2: #{tpu_custom_call.1} parent=1 // pred_check
      _
    $region3: #{tpu_custom_call.1} parent=1 // pred_check_branch
      %12 = sbr.rel (0) target = $region5
    $region4: #{tpu_custom_call.1} parent=1 // pred_region
      _
    $region5: #{tpu_custom_call.1} parent=1 // pred_fallthru
      _
    // Predicated region
    $region6: #{tpu_custom_call.1} parent=1 // pred_check
      _
    $region7: #{tpu_custom_call.1} parent=1 // pred_check_branch
      %14 = sbr.rel (0) target = $region9
    $region8: #{tpu_custom_call.1} parent=1 // pred_region
      _
    $region9: #{tpu_custom_call.1} parent=1 // pred_fallthru
      _
    // Predicated region
    $region10: #{tpu_custom_call.1} parent=1 // pred_check
      _
    $region11: #{tpu_custom_call.1} parent=1 // pred_check_branch
      %16 = sbr.rel (0) target = $region13
    $region12: #{tpu_custom_call.1} parent=1 // pred_region
      _
    $region13: #{tpu_custom_call.1} parent=1 // pred_fallthru
      _
    // Predicated region
    $region14: #{tpu_custom_call.1} parent=1 // pred_check
      _
    $region15: #{tpu_custom_call.1} parent=1 // pred_check_branch
      %18 = sbr.rel (0) target = $region17
    $region16: #{tpu_custom_call.1} parent=1 // pred_region
      _
    $region17: #{tpu_custom_call.1} parent=1 // pred_fallthru
      _
    // Predicated region
    $region18: #{tpu_custom_call.1} parent=1 // pred_check
      _
    $region19: #{tpu_custom_call.1} parent=1 // pred_check_branch
      %20 = sbr.rel (0) target = $region21
    $region20: #{tpu_custom_call.1} parent=1 // pred_region
      _
    $region21: #{tpu_custom_call.1} parent=1 // pred_fallthru
      _
    %v21 = vld [vmem:[%s0] sm:$0xff]
    %v22 = vld [vmem:[%s1] sm:$0x1]
    %v23 = vld [vmem:[%s2] sm:$0x1]
    %v24 = vld [vmem:[%s3] sm:$0xff]
    %v25 = vld [vmem:[%s3 + $0x8] sm:$0xff]
    %v26 = vld [vmem:[%s3 + $0x10] sm:$0xff]
    %v27 = vld [vmem:[%s3 + $0x18] sm:$0xff]
    %v28 = vld [vmem:[%s3 + $0x20] sm:$0xff]
    %v29 = vld [vmem:[%s3 + $0x28] sm:$0xff]
    %v30 = vld [vmem:[%s3 + $0x30] sm:$0xff]
    %v31 = vld [vmem:[%s3 + $0x38] sm:$0xff]
    %v32 = vld [vmem:[%s3 + $0x40] sm:$0xff]
    %v33 = vld [vmem:[%s3 + $0x48] sm:$0xff]
    %v34 = vld [vmem:[%s3 + $0x50] sm:$0xff]
    %v35 = vld [vmem:[%s3 + $0x58] sm:$0xff]
    %v36 = vld [vmem:[%s3 + $0x60] sm:$0xff]
    %v37 = vld [vmem:[%s3 + $0x68] sm:$0xff]
    %v38 = vld [vmem:[%s3 + $0x70] sm:$0xff]
    %v39 = vld [vmem:[%s3 + $0x78] sm:$0xff]
    %v40 = vld [vmem:[%s4] sm:$0xff]
    %v41 = vld [vmem:[%s4 + $0x8] sm:$0xff]
    %v42 = vand.u32 %v39, 4294901760
    %43 = vmatpush.msra.mxu0 %v42
    %v44 = vand.u32 %v38, 4294901760
    %45 = vmatpush.msra.mxu0 %v44
    %v46 = vand.u32 %v37, 4294901760
    %47 = vmatpush.msra.mxu0 %v46
    %v48 = vand.u32 %v36, 4294901760
    %49 = vmatpush.msra.mxu0 %v48
    %v50 = vand.u32 %v35, 4294901760
    %51 = vmatpush.msra.mxu0 %v50
    %v52 = vand.u32 %v34, 4294901760
    %53 = vmatpush.msra.mxu0 %v52
    %v54 = vand.u32 %v33, 4294901760
    %55 = vmatpush.msra.mxu0 %v54
    %v56 = vand.u32 %v32, 4294901760
    %57 = vmatpush.msra.mxu0 %v56
    %v58 = vand.u32 %v31, 4294901760
    %59 = vmatpush.msra.mxu0 %v58
    %v60 = vand.u32 %v30, 4294901760
    %61 = vmatpush.msra.mxu0 %v60
    %v62 = vand.u32 %v29, 4294901760
    %63 = vmatpush.msra.mxu0 %v62
    %v64 = vand.u32 %v28, 4294901760
    %65 = vmatpush.msra.mxu0 %v64
    %v66 = vand.u32 %v27, 4294901760
    %67 = vmatpush.msra.mxu0 %v66
    %v68 = vand.u32 %v26, 4294901760
    %69 = vmatpush.msra.mxu0 %v68
    %v70 = vand.u32 %v25, 4294901760
    %71 = vmatpush.msra.mxu0 %v70
    %v72 = vand.u32 %v24, 4294901760
    %73 = vmatpush.msra.mxu0 %v72
    %v74 = vand.u32 %v21, 4294901760
    %v75 = vsub.f32 %v21, %v74
    %v76 = vand.u32 %v75, 4294901760
    %v77 = vsub.f32 %v75, %v76
    %v78 = vand.u32 %v77, 4294901760
    %79 = vmatmul.f32.gmra.mxu0 %v78
    %v80 = vpop.f32.mrf.mxu0
    %v81 = vadd.f32 0.0, %v80
    %82 = vdwg.mxu0
    %v83 = vand.u32 %v39, 4294901760
    %v84 = vsub.f32 %v39, %v83
    %v85 = vand.u32 %v84, 4294901760
    %v86 = vsub.f32 %v84, %v85
    %v87 = vand.u32 %v86, 4294901760
    %88 = vmatpush.msra.mxu0 %v87
    %v89 = vand.u32 %v38, 4294901760
    %v90 = vsub.f32 %v38, %v89
    %v91 = vand.u32 %v90, 4294901760
    %v92 = vsub.f32 %v90, %v91
    %v93 = vand.u32 %v92, 4294901760
    %94 = vmatpush.msra.mxu0 %v93
    %v95 = vand.u32 %v37, 4294901760
    %v96 = vsub.f32 %v37, %v95
    %v97 = vand.u32 %v96, 4294901760
    %v98 = vsub.f32 %v96, %v97
    %v99 = vand.u32 %v98, 4294901760
    %100 = vmatpush.msra.mxu0 %v99
    %v101 = vand.u32 %v36, 4294901760
    %v102 = vsub.f32 %v36, %v101
    %v103 = vand.u32 %v102, 4294901760
    %v104 = vsub.f32 %v102, %v103
    %v105 = vand.u32 %v104, 4294901760
    %106 = vmatpush.msra.mxu0 %v105
    %v107 = vand.u32 %v35, 4294901760
    %v108 = vsub.f32 %v35, %v107
    %v109 = vand.u32 %v108, 4294901760
    %v110 = vsub.f32 %v108, %v109
    %v111 = vand.u32 %v110, 4294901760
    %112 = vmatpush.msra.mxu0 %v111
    %v113 = vand.u32 %v34, 4294901760
    %v114 = vsub.f32 %v34, %v113
    %v115 = vand.u32 %v114, 4294901760
    %v116 = vsub.f32 %v114, %v115
    %v117 = vand.u32 %v116, 4294901760
    %118 = vmatpush.msra.mxu0 %v117
    %v119 = vand.u32 %v33, 4294901760
    %v120 = vsub.f32 %v33, %v119
    %v121 = vand.u32 %v120, 4294901760
    %v122 = vsub.f32 %v120, %v121
    %v123 = vand.u32 %v122, 4294901760
    %124 = vmatpush.msra.mxu0 %v123
    %v125 = vand.u32 %v32, 4294901760
    %v126 = vsub.f32 %v32, %v125
    %v127 = vand.u32 %v126, 4294901760
    %v128 = vsub.f32 %v126, %v127
    %v129 = vand.u32 %v128, 4294901760
    %130 = vmatpush.msra.mxu0 %v129
    %v131 = vand.u32 %v31, 4294901760
    %v132 = vsub.f32 %v31, %v131
    %v133 = vand.u32 %v132, 4294901760
    %v134 = vsub.f32 %v132, %v133
    %v135 = vand.u32 %v134, 4294901760
    %136 = vmatpush.msra.mxu0 %v135
    %v137 = vand.u32 %v30, 4294901760
    %v138 = vsub.f32 %v30, %v137
    %v139 = vand.u32 %v138, 4294901760
    %v140 = vsub.f32 %v138, %v139
    %v141 = vand.u32 %v140, 4294901760
    %142 = vmatpush.msra.mxu0 %v141
    %v143 = vand.u32 %v29, 4294901760
    %v144 = vsub.f32 %v29, %v143
    %v145 = vand.u32 %v144, 4294901760
    %v146 = vsub.f32 %v144, %v145
    %v147 = vand.u32 %v146, 4294901760
    %148 = vmatpush.msra.mxu0 %v147
    %v149 = vand.u32 %v28, 4294901760
    %v150 = vsub.f32 %v28, %v149
    %v151 = vand.u32 %v150, 4294901760
    %v152 = vsub.f32 %v150, %v151
    %v153 = vand.u32 %v152, 4294901760
    %154 = vmatpush.msra.mxu0 %v153
    %v155 = vand.u32 %v27, 4294901760
    %v156 = vsub.f32 %v27, %v155
    %v157 = vand.u32 %v156, 4294901760
    %v158 = vsub.f32 %v156, %v157
    %v159 = vand.u32 %v158, 4294901760
    %160 = vmatpush.msra.mxu0 %v159
    %v161 = vand.u32 %v26, 4294901760
    %v162 = vsub.f32 %v26, %v161
    %v163 = vand.u32 %v162, 4294901760
    %v164 = vsub.f32 %v162, %v163
    %v165 = vand.u32 %v164, 4294901760
    %166 = vmatpush.msra.mxu0 %v165
    %v167 = vand.u32 %v25, 4294901760
    %v168 = vsub.f32 %v25, %v167
    %v169 = vand.u32 %v168, 4294901760
    %v170 = vsub.f32 %v168, %v169
    %v171 = vand.u32 %v170, 4294901760
    %172 = vmatpush.msra.mxu0 %v171
    %v173 = vand.u32 %v24, 4294901760
    %v174 = vsub.f32 %v24, %v173
    %v175 = vand.u32 %v174, 4294901760
    %v176 = vsub.f32 %v174, %v175
    %v177 = vand.u32 %v176, 4294901760
    %178 = vmatpush.msra.mxu0 %v177
    %v179 = vand.u32 %v21, 4294901760
    %180 = vmatmul.f32.gmra.mxu0 %v179
    %v181 = vpop.f32.mrf.mxu0
    %v182 = vadd.f32 %v81, %v181
    %183 = vdwg.mxu0
    %v184 = vand.u32 %v39, 4294901760
    %v185 = vsub.f32 %v39, %v184
    %186 = vmatpush.msra.mxu0 %v185
    %v187 = vand.u32 %v38, 4294901760
    %v188 = vsub.f32 %v38, %v187
    %189 = vmatpush.msra.mxu0 %v188
    %v190 = vand.u32 %v37, 4294901760
    %v191 = vsub.f32 %v37, %v190
    %192 = vmatpush.msra.mxu0 %v191
    %v193 = vand.u32 %v36, 4294901760
    %v194 = vsub.f32 %v36, %v193
    %195 = vmatpush.msra.mxu0 %v194
    %v196 = vand.u32 %v35, 4294901760
    %v197 = vsub.f32 %v35, %v196
    %198 = vmatpush.msra.mxu0 %v197
    %v199 = vand.u32 %v34, 4294901760
    %v200 = vsub.f32 %v34, %v199
    %201 = vmatpush.msra.mxu0 %v200
    %v202 = vand.u32 %v33, 4294901760
    %v203 = vsub.f32 %v33, %v202
    %204 = vmatpush.msra.mxu0 %v203
    %v205 = vand.u32 %v32, 4294901760
    %v206 = vsub.f32 %v32, %v205
    %207 = vmatpush.msra.mxu0 %v206
    %v208 = vand.u32 %v31, 4294901760
    %v209 = vsub.f32 %v31, %v208
    %210 = vmatpush.msra.mxu0 %v209
    %v211 = vand.u32 %v30, 4294901760
    %v212 = vsub.f32 %v30, %v211
    %213 = vmatpush.msra.mxu0 %v212
    %v214 = vand.u32 %v29, 4294901760
    %v215 = vsub.f32 %v29, %v214
    %216 = vmatpush.msra.mxu0 %v215
    %v217 = vand.u32 %v28, 4294901760
    %v218 = vsub.f32 %v28, %v217
    %219 = vmatpush.msra.mxu0 %v218
    %v220 = vand.u32 %v27, 4294901760
    %v221 = vsub.f32 %v27, %v220
    %222 = vmatpush.msra.mxu0 %v221
    %v223 = vand.u32 %v26, 4294901760
    %v224 = vsub.f32 %v26, %v223
    %225 = vmatpush.msra.mxu0 %v224
    %v226 = vand.u32 %v25, 4294901760
    %v227 = vsub.f32 %v25, %v226
    %228 = vmatpush.msra.mxu0 %v227
    %v229 = vand.u32 %v24, 4294901760
    %v230 = vsub.f32 %v24, %v229
    %231 = vmatpush.msra.mxu0 %v230
    %v232 = vand.u32 %v21, 4294901760
    %v233 = vsub.f32 %v21, %v232
    %234 = vmatmul.f32.gmra.mxu0 %v233
    %v235 = vpop.f32.mrf.mxu0
    %v236 = vadd.f32 %v182, %v235
    %237 = vdwg.mxu0
    %v238 = vand.u32 %v39, 4294901760
    %239 = vmatpush.msra.mxu0 %v238
    %v240 = vand.u32 %v38, 4294901760
    %241 = vmatpush.msra.mxu0 %v240
    %v242 = vand.u32 %v37, 4294901760
    %243 = vmatpush.msra.mxu0 %v242
    %v244 = vand.u32 %v36, 4294901760
    %245 = vmatpush.msra.mxu0 %v244
    %v246 = vand.u32 %v35, 4294901760
    %247 = vmatpush.msra.mxu0 %v246
    %v248 = vand.u32 %v34, 4294901760
    %249 = vmatpush.msra.mxu0 %v248
    %v250 = vand.u32 %v33, 4294901760
    %251 = vmatpush.msra.mxu0 %v250
    %v252 = vand.u32 %v32, 4294901760
    %253 = vmatpush.msra.mxu0 %v252
    %v254 = vand.u32 %v31, 4294901760
    %255 = vmatpush.msra.mxu0 %v254
    %v256 = vand.u32 %v30, 4294901760
    %257 = vmatpush.msra.mxu0 %v256
    %v258 = vand.u32 %v29, 4294901760
    %259 = vmatpush.msra.mxu0 %v258
    %v260 = vand.u32 %v28, 4294901760
    %261 = vmatpush.msra.mxu0 %v260
    %v262 = vand.u32 %v27, 4294901760
    %263 = vmatpush.msra.mxu0 %v262
    %v264 = vand.u32 %v26, 4294901760
    %265 = vmatpush.msra.mxu0 %v264
    %v266 = vand.u32 %v25, 4294901760
    %267 = vmatpush.msra.mxu0 %v266
    %v268 = vand.u32 %v24, 4294901760
    %269 = vmatpush.msra.mxu0 %v268
    %v270 = vand.u32 %v21, 4294901760
    %v271 = vsub.f32 %v21, %v270
    %v272 = vand.u32 %v271, 4294901760
    %273 = vmatmul.f32.gmra.mxu0 %v272
    %v274 = vpop.f32.mrf.mxu0
    %v275 = vadd.f32 %v236, %v274
    %276 = vdwg.mxu0
    %v277 = vand.u32 %v39, 4294901760
    %v278 = vsub.f32 %v39, %v277
    %v279 = vand.u32 %v278, 4294901760
    %280 = vmatpush.msra.mxu0 %v279
    %v281 = vand.u32 %v38, 4294901760
    %v282 = vsub.f32 %v38, %v281
    %v283 = vand.u32 %v282, 4294901760
    %284 = vmatpush.msra.mxu0 %v283
    %v285 = vand.u32 %v37, 4294901760
    %v286 = vsub.f32 %v37, %v285
    %v287 = vand.u32 %v286, 4294901760
    %288 = vmatpush.msra.mxu0 %v287
    %v289 = vand.u32 %v36, 4294901760
    %v290 = vsub.f32 %v36, %v289
    %v291 = vand.u32 %v290, 4294901760
    %292 = vmatpush.msra.mxu0 %v291
    %v293 = vand.u32 %v35, 4294901760
    %v294 = vsub.f32 %v35, %v293
    %v295 = vand.u32 %v294, 4294901760
    %296 = vmatpush.msra.mxu0 %v295
    %v297 = vand.u32 %v34, 4294901760
    %v298 = vsub.f32 %v34, %v297
    %v299 = vand.u32 %v298, 4294901760
    %300 = vmatpush.msra.mxu0 %v299
    %v301 = vand.u32 %v33, 4294901760
    %v302 = vsub.f32 %v33, %v301
    %v303 = vand.u32 %v302, 4294901760
    %304 = vmatpush.msra.mxu0 %v303
    %v305 = vand.u32 %v32, 4294901760
    %v306 = vsub.f32 %v32, %v305
    %v307 = vand.u32 %v306, 4294901760
    %308 = vmatpush.msra.mxu0 %v307
    %v309 = vand.u32 %v31, 4294901760
    %v310 = vsub.f32 %v31, %v309
    %v311 = vand.u32 %v310, 4294901760
    %312 = vmatpush.msra.mxu0 %v311
    %v313 = vand.u32 %v30, 4294901760
    %v314 = vsub.f32 %v30, %v313
    %v315 = vand.u32 %v314, 4294901760
    %316 = vmatpush.msra.mxu0 %v315
    %v317 = vand.u32 %v29, 4294901760
    %v318 = vsub.f32 %v29, %v317
    %v319 = vand.u32 %v318, 4294901760
    %320 = vmatpush.msra.mxu0 %v319
    %v321 = vand.u32 %v28, 4294901760
    %v322 = vsub.f32 %v28, %v321
    %v323 = vand.u32 %v322, 4294901760
    %324 = vmatpush.msra.mxu0 %v323
    %v325 = vand.u32 %v27, 4294901760
    %v326 = vsub.f32 %v27, %v325
    %v327 = vand.u32 %v326, 4294901760
    %328 = vmatpush.msra.mxu0 %v327
    %v329 = vand.u32 %v26, 4294901760
    %v330 = vsub.f32 %v26, %v329
    %v331 = vand.u32 %v330, 4294901760
    %332 = vmatpush.msra.mxu0 %v331
    %v333 = vand.u32 %v25, 4294901760
    %v334 = vsub.f32 %v25, %v333
    %v335 = vand.u32 %v334, 4294901760
    %336 = vmatpush.msra.mxu0 %v335
    %v337 = vand.u32 %v24, 4294901760
    %v338 = vsub.f32 %v24, %v337
    %v339 = vand.u32 %v338, 4294901760
    %340 = vmatpush.msra.mxu0 %v339
    %v341 = vand.u32 %v21, 4294901760
    %342 = vmatmul.f32.gmra.mxu0 %v341
    %v343 = vpop.f32.mrf.mxu0
    %v344 = vadd.f32 %v275, %v343
    %345 = vdwg.mxu0
    %v346 = vand.u32 %v39, 4294901760
    %347 = vmatpush.msra.mxu0 %v346
    %v348 = vand.u32 %v38, 4294901760
    %349 = vmatpush.msra.mxu0 %v348
    %v350 = vand.u32 %v37, 4294901760
    %351 = vmatpush.msra.mxu0 %v350
    %v352 = vand.u32 %v36, 4294901760
    %353 = vmatpush.msra.mxu0 %v352
    %v354 = vand.u32 %v35, 4294901760
    %355 = vmatpush.msra.mxu0 %v354
    %v356 = vand.u32 %v34, 4294901760
    %357 = vmatpush.msra.mxu0 %v356
    %v358 = vand.u32 %v33, 4294901760
    %359 = vmatpush.msra.mxu0 %v358
    %v360 = vand.u32 %v32, 4294901760
    %361 = vmatpush.msra.mxu0 %v360
    %v362 = vand.u32 %v31, 4294901760
    %363 = vmatpush.msra.mxu0 %v362
    %v364 = vand.u32 %v30, 4294901760
    %365 = vmatpush.msra.mxu0 %v364
    %v366 = vand.u32 %v29, 4294901760
    %367 = vmatpush.msra.mxu0 %v366
    %v368 = vand.u32 %v28, 4294901760
    %369 = vmatpush.msra.mxu0 %v368
    %v370 = vand.u32 %v27, 4294901760
    %371 = vmatpush.msra.mxu0 %v370
    %v372 = vand.u32 %v26, 4294901760
    %373 = vmatpush.msra.mxu0 %v372
    %v374 = vand.u32 %v25, 4294901760
    %375 = vmatpush.msra.mxu0 %v374
    %v376 = vand.u32 %v24, 4294901760
    %377 = vmatpush.msra.mxu0 %v376
    %v378 = vand.u32 %v21, 4294901760
    %379 = vmatmul.f32.gmra.mxu0 %v378
    %v380 = vpop.f32.mrf.mxu0
    %v381 = vadd.f32 %v344, %v380
    %382 = vdwg.mxu0
    %vm383 = vcmask 130048
    %v385 = vsel %vm383, %v381, 0
    %387 = vmatpush.msra.mxu0 0.0
    %388 = vmatpush.msra.mxu0 0.0
    %389 = vmatpush.msra.mxu0 0.0
    %390 = vmatpush.msra.mxu0 0.0
    %391 = vmatpush.msra.mxu0 0.0
    %392 = vmatpush.msra.mxu0 0.0
    %393 = vmatpush.msra.mxu0 0.0
    %394 = vmatpush.msra.mxu0 0.0
    %395 = vmatpush.msra.mxu0 0.0
    %396 = vmatpush.msra.mxu0 0.0
    %397 = vmatpush.msra.mxu0 0.0
    %398 = vmatpush.msra.mxu0 0.0
    %399 = vmatpush.msra.mxu0 0.0
    %400 = vmatpush.msra.mxu0 0.0
    %v401 = vand.u32 %v41, 4294901760
    %402 = vmatpush.msra.mxu0 %v401
    %v403 = vand.u32 %v40, 4294901760
    %404 = vmatpush.msra.mxu0 %v403
    %v405 = vand.u32 %v385, 4294901760
    %v406 = vsub.f32 %v385, %v405
    %v407 = vand.u32 %v406, 4294901760
    %v408 = vsub.f32 %v406, %v407
    %v409 = vand.u32 %v408, 4294901760
    %410 = vmatmul.f32.gmra.mxu0 %v409
    %v411 = vpop.f32.mrf.mxu0
    %v412 = vadd.f32 0.0, %v411
    %413 = vdwg.mxu0
    %414 = vmatpush.msra.mxu0 0.0
    %415 = vmatpush.msra.mxu0 0.0
    %416 = vmatpush.msra.mxu0 0.0
    %417 = vmatpush.msra.mxu0 0.0
    %418 = vmatpush.msra.mxu0 0.0
    %419 = vmatpush.msra.mxu0 0.0
    %420 = vmatpush.msra.mxu0 0.0
    %421 = vmatpush.msra.mxu0 0.0
    %422 = vmatpush.msra.mxu0 0.0
    %423 = vmatpush.msra.mxu0 0.0
    %424 = vmatpush.msra.mxu0 0.0
    %425 = vmatpush.msra.mxu0 0.0
    %426 = vmatpush.msra.mxu0 0.0
    %427 = vmatpush.msra.mxu0 0.0
    %v428 = vand.u32 %v41, 4294901760
    %v429 = vsub.f32 %v41, %v428
    %v430 = vand.u32 %v429, 4294901760
    %v431 = vsub.f32 %v429, %v430
    %v432 = vand.u32 %v431, 4294901760
    %433 = vmatpush.msra.mxu0 %v432
    %v434 = vand.u32 %v40, 4294901760
    %v435 = vsub.f32 %v40, %v434
    %v436 = vand.u32 %v435, 4294901760
    %v437 = vsub.f32 %v435, %v436
    %v438 = vand.u32 %v437, 4294901760
    %439 = vmatpush.msra.mxu0 %v438
    %v440 = vand.u32 %v385, 4294901760
    %441 = vmatmul.f32.gmra.mxu0 %v440
    %v442 = vpop.f32.mrf.mxu0
    %v443 = vadd.f32 %v412, %v442
    %444 = vdwg.mxu0
    %445 = vmatpush.msra.mxu0 0.0
    %446 = vmatpush.msra.mxu0 0.0
    %447 = vmatpush.msra.mxu0 0.0
    %448 = vmatpush.msra.mxu0 0.0
    %449 = vmatpush.msra.mxu0 0.0
    %450 = vmatpush.msra.mxu0 0.0
    %451 = vmatpush.msra.mxu0 0.0
    %452 = vmatpush.msra.mxu0 0.0
    %453 = vmatpush.msra.mxu0 0.0
    %454 = vmatpush.msra.mxu0 0.0
    %455 = vmatpush.msra.mxu0 0.0
    %456 = vmatpush.msra.mxu0 0.0
    %457 = vmatpush.msra.mxu0 0.0
    %458 = vmatpush.msra.mxu0 0.0
    %v459 = vand.u32 %v41, 4294901760
    %v460 = vsub.f32 %v41, %v459
    %461 = vmatpush.msra.mxu0 %v460
    %v462 = vand.u32 %v40, 4294901760
    %v463 = vsub.f32 %v40, %v462
    %464 = vmatpush.msra.mxu0 %v463
    %v465 = vand.u32 %v385, 4294901760
    %v466 = vsub.f32 %v385, %v465
    %467 = vmatmul.f32.gmra.mxu0 %v466
    %v468 = vpop.f32.mrf.mxu0
    %v469 = vadd.f32 %v443, %v468
    %470 = vdwg.mxu0
    %471 = vmatpush.msra.mxu0 0.0
    %472 = vmatpush.msra.mxu0 0.0
    %473 = vmatpush.msra.mxu0 0.0
    %474 = vmatpush.msra.mxu0 0.0
    %475 = vmatpush.msra.mxu0 0.0
    %476 = vmatpush.msra.mxu0 0.0
    %477 = vmatpush.msra.mxu0 0.0
    %478 = vmatpush.msra.mxu0 0.0
    %479 = vmatpush.msra.mxu0 0.0
    %480 = vmatpush.msra.mxu0 0.0
    %481 = vmatpush.msra.mxu0 0.0
    %482 = vmatpush.msra.mxu0 0.0
    %483 = vmatpush.msra.mxu0 0.0
    %484 = vmatpush.msra.mxu0 0.0
    %v485 = vand.u32 %v41, 4294901760
    %486 = vmatpush.msra.mxu0 %v485
    %v487 = vand.u32 %v40, 4294901760
    %488 = vmatpush.msra.mxu0 %v487
    %v489 = vand.u32 %v385, 4294901760
    %v490 = vsub.f32 %v385, %v489
    %v491 = vand.u32 %v490, 4294901760
    %492 = vmatmul.f32.gmra.mxu0 %v491
    %v493 = vpop.f32.mrf.mxu0
    %v494 = vadd.f32 %v469, %v493
    %495 = vdwg.mxu0
    %496 = vmatpush.msra.mxu0 0.0
    %497 = vmatpush.msra.mxu0 0.0
    %498 = vmatpush.msra.mxu0 0.0
    %499 = vmatpush.msra.mxu0 0.0
    %500 = vmatpush.msra.mxu0 0.0
    %501 = vmatpush.msra.mxu0 0.0
    %502 = vmatpush.msra.mxu0 0.0
    %503 = vmatpush.msra.mxu0 0.0
    %504 = vmatpush.msra.mxu0 0.0
    %505 = vmatpush.msra.mxu0 0.0
    %506 = vmatpush.msra.mxu0 0.0
    %507 = vmatpush.msra.mxu0 0.0
    %508 = vmatpush.msra.mxu0 0.0
    %509 = vmatpush.msra.mxu0 0.0
    %v510 = vand.u32 %v41, 4294901760
    %v511 = vsub.f32 %v41, %v510
    %v512 = vand.u32 %v511, 4294901760
    %513 = vmatpush.msra.mxu0 %v512
    %v514 = vand.u32 %v40, 4294901760
    %v515 = vsub.f32 %v40, %v514
    %v516 = vand.u32 %v515, 4294901760
    %517 = vmatpush.msra.mxu0 %v516
    %v518 = vand.u32 %v385, 4294901760
    %519 = vmatmul.f32.gmra.mxu0 %v518
    %v520 = vpop.f32.mrf.mxu0
    %v521 = vadd.f32 %v494, %v520
    %522 = vdwg.mxu0
    %523 = vmatpush.msra.mxu0 0.0
    %524 = vmatpush.msra.mxu0 0.0
    %525 = vmatpush.msra.mxu0 0.0
    %526 = vmatpush.msra.mxu0 0.0
    %527 = vmatpush.msra.mxu0 0.0
    %528 = vmatpush.msra.mxu0 0.0
    %529 = vmatpush.msra.mxu0 0.0
    %530 = vmatpush.msra.mxu0 0.0
    %531 = vmatpush.msra.mxu0 0.0
    %532 = vmatpush.msra.mxu0 0.0
    %533 = vmatpush.msra.mxu0 0.0
    %534 = vmatpush.msra.mxu0 0.0
    %535 = vmatpush.msra.mxu0 0.0
    %536 = vmatpush.msra.mxu0 0.0
    %v537 = vand.u32 %v41, 4294901760
    %538 = vmatpush.msra.mxu0 %v537
    %v539 = vand.u32 %v40, 4294901760
    %540 = vmatpush.msra.mxu0 %v539
    %v541 = vand.u32 %v385, 4294901760
    %542 = vmatmul.f32.gmra.mxu0 %v541
    %v543 = vpop.f32.mrf.mxu0
    %v544 = vadd.f32 %v521, %v543
    %545 = vdwg.mxu0
    %v546 = vsub.f32 %v21, %v544
    %v547 = vmul.f32 %v546, %v546
    %v548 = vand.u32 %v39, 4294901760
    %549 = vmatpush.msra.mxu0 %v548
    %v550 = vand.u32 %v38, 4294901760
    %551 = vmatpush.msra.mxu0 %v550
    %v552 = vand.u32 %v37, 4294901760
    %553 = vmatpush.msra.mxu0 %v552
    %v554 = vand.u32 %v36, 4294901760
    %555 = vmatpush.msra.mxu0 %v554
    %v556 = vand.u32 %v35, 4294901760
    %557 = vmatpush.msra.mxu0 %v556
    %v558 = vand.u32 %v34, 4294901760
    %559 = vmatpush.msra.mxu0 %v558
    %v560 = vand.u32 %v33, 4294901760
    %561 = vmatpush.msra.mxu0 %v560
    %v562 = vand.u32 %v32, 4294901760
    %563 = vmatpush.msra.mxu0 %v562
    %v564 = vand.u32 %v31, 4294901760
    %565 = vmatpush.msra.mxu0 %v564
    %v566 = vand.u32 %v30, 4294901760
    %567 = vmatpush.msra.mxu0 %v566
    %v568 = vand.u32 %v29, 4294901760
    %569 = vmatpush.msra.mxu0 %v568
    %v570 = vand.u32 %v28, 4294901760
    %571 = vmatpush.msra.mxu0 %v570
    %v572 = vand.u32 %v27, 4294901760
    %573 = vmatpush.msra.mxu0 %v572
    %v574 = vand.u32 %v26, 4294901760
    %575 = vmatpush.msra.mxu0 %v574
    %v576 = vand.u32 %v25, 4294901760
    %577 = vmatpush.msra.mxu0 %v576
    %v578 = vand.u32 %v24, 4294901760
    %579 = vmatpush.msra.mxu0 %v578
    %v580 = vand.u32 %v547, 4294901760
    %v581 = vsub.f32 %v547, %v580
    %v582 = vand.u32 %v581, 4294901760
    %v583 = vsub.f32 %v581, %v582
    %v584 = vand.u32 %v583, 4294901760
    %585 = vmatmul.f32.gmra.mxu0 %v584
    %v586 = vpop.f32.mrf.mxu0
    %v587 = vadd.f32 1e-05, %v586
    %588 = vdwg.mxu0
    %v589 = vand.u32 %v39, 4294901760
    %v590 = vsub.f32 %v39, %v589
    %v591 = vand.u32 %v590, 4294901760
    %v592 = vsub.f32 %v590, %v591
    %v593 = vand.u32 %v592, 4294901760
    %594 = vmatpush.msra.mxu0 %v593
    %v595 = vand.u32 %v38, 4294901760
    %v596 = vsub.f32 %v38, %v595
    %v597 = vand.u32 %v596, 4294901760
    %v598 = vsub.f32 %v596, %v597
    %v599 = vand.u32 %v598, 4294901760
    %600 = vmatpush.msra.mxu0 %v599
    %v601 = vand.u32 %v37, 4294901760
    %v602 = vsub.f32 %v37, %v601
    %v603 = vand.u32 %v602, 4294901760
    %v604 = vsub.f32 %v602, %v603
    %v605 = vand.u32 %v604, 4294901760
    %606 = vmatpush.msra.mxu0 %v605
    %v607 = vand.u32 %v36, 4294901760
    %v608 = vsub.f32 %v36, %v607
    %v609 = vand.u32 %v608, 4294901760
    %v610 = vsub.f32 %v608, %v609
    %v611 = vand.u32 %v610, 4294901760
    %612 = vmatpush.msra.mxu0 %v611
    %v613 = vand.u32 %v35, 4294901760
    %v614 = vsub.f32 %v35, %v613
    %v615 = vand.u32 %v614, 4294901760
    %v616 = vsub.f32 %v614, %v615
    %v617 = vand.u32 %v616, 4294901760
    %618 = vmatpush.msra.mxu0 %v617
    %v619 = vand.u32 %v34, 4294901760
    %v620 = vsub.f32 %v34, %v619
    %v621 = vand.u32 %v620, 4294901760
    %v622 = vsub.f32 %v620, %v621
    %v623 = vand.u32 %v622, 4294901760
    %624 = vmatpush.msra.mxu0 %v623
    %v625 = vand.u32 %v33, 4294901760
    %v626 = vsub.f32 %v33, %v625
    %v627 = vand.u32 %v626, 4294901760
    %v628 = vsub.f32 %v626, %v627
    %v629 = vand.u32 %v628, 4294901760
    %630 = vmatpush.msra.mxu0 %v629
    %v631 = vand.u32 %v32, 4294901760
    %v632 = vsub.f32 %v32, %v631
    %v633 = vand.u32 %v632, 4294901760
    %v634 = vsub.f32 %v632, %v633
    %v635 = vand.u32 %v634, 4294901760
    %636 = vmatpush.msra.mxu0 %v635
    %v637 = vand.u32 %v31, 4294901760
    %v638 = vsub.f32 %v31, %v637
    %v639 = vand.u32 %v638, 4294901760
    %v640 = vsub.f32 %v638, %v639
    %v641 = vand.u32 %v640, 4294901760
    %642 = vmatpush.msra.mxu0 %v641
    %v643 = vand.u32 %v30, 4294901760
    %v644 = vsub.f32 %v30, %v643
    %v645 = vand.u32 %v644, 4294901760
    %v646 = vsub.f32 %v644, %v645
    %v647 = vand.u32 %v646, 4294901760
    %648 = vmatpush.msra.mxu0 %v647
    %v649 = vand.u32 %v29, 4294901760
    %v650 = vsub.f32 %v29, %v649
    %v651 = vand.u32 %v650, 4294901760
    %v652 = vsub.f32 %v650, %v651
    %v653 = vand.u32 %v652, 4294901760
    %654 = vmatpush.msra.mxu0 %v653
    %v655 = vand.u32 %v28, 4294901760
    %v656 = vsub.f32 %v28, %v655
    %v657 = vand.u32 %v656, 4294901760
    %v658 = vsub.f32 %v656, %v657
    %v659 = vand.u32 %v658, 4294901760
    %660 = vmatpush.msra.mxu0 %v659
    %v661 = vand.u32 %v27, 4294901760
    %v662 = vsub.f32 %v27, %v661
    %v663 = vand.u32 %v662, 4294901760
    %v664 = vsub.f32 %v662, %v663
    %v665 = vand.u32 %v664, 4294901760
    %666 = vmatpush.msra.mxu0 %v665
    %v667 = vand.u32 %v26, 4294901760
    %v668 = vsub.f32 %v26, %v667
    %v669 = vand.u32 %v668, 4294901760
    %v670 = vsub.f32 %v668, %v669
    %v671 = vand.u32 %v670, 4294901760
    %672 = vmatpush.msra.mxu0 %v671
    %v673 = vand.u32 %v25, 4294901760
    %v674 = vsub.f32 %v25, %v673
    %v675 = vand.u32 %v674, 4294901760
    %v676 = vsub.f32 %v674, %v675
    %v677 = vand.u32 %v676, 4294901760
    %678 = vmatpush.msra.mxu0 %v677
    %v679 = vand.u32 %v24, 4294901760
    %v680 = vsub.f32 %v24, %v679
    %v681 = vand.u32 %v680, 4294901760
    %v682 = vsub.f32 %v680, %v681
    %v683 = vand.u32 %v682, 4294901760
    %684 = vmatpush.msra.mxu0 %v683
    %v685 = vand.u32 %v547, 4294901760
    %686 = vmatmul.f32.gmra.mxu0 %v685
    %v687 = vpop.f32.mrf.mxu0
    %v688 = vadd.f32 %v587, %v687
    %689 = vdwg.mxu0
    %v690 = vand.u32 %v39, 4294901760
    %v691 = vsub.f32 %v39, %v690
    %692 = vmatpush.msra.mxu0 %v691
    %v693 = vand.u32 %v38, 4294901760
    %v694 = vsub.f32 %v38, %v693
    %695 = vmatpush.msra.mxu0 %v694
    %v696 = vand.u32 %v37, 4294901760
    %v697 = vsub.f32 %v37, %v696
    %698 = vmatpush.msra.mxu0 %v697
    %v699 = vand.u32 %v36, 4294901760
    %v700 = vsub.f32 %v36, %v699
    %701 = vmatpush.msra.mxu0 %v700
    %v702 = vand.u32 %v35, 4294901760
    %v703 = vsub.f32 %v35, %v702
    %704 = vmatpush.msra.mxu0 %v703
    %v705 = vand.u32 %v34, 4294901760
    %v706 = vsub.f32 %v34, %v705
    %707 = vmatpush.msra.mxu0 %v706
    %v708 = vand.u32 %v33, 4294901760
    %v709 = vsub.f32 %v33, %v708
    %710 = vmatpush.msra.mxu0 %v709
    %v711 = vand.u32 %v32, 4294901760
    %v712 = vsub.f32 %v32, %v711
    %713 = vmatpush.msra.mxu0 %v712
    %v714 = vand.u32 %v31, 4294901760
    %v715 = vsub.f32 %v31, %v714
    %716 = vmatpush.msra.mxu0 %v715
    %v717 = vand.u32 %v30, 4294901760
    %v718 = vsub.f32 %v30, %v717
    %719 = vmatpush.msra.mxu0 %v718
    %v720 = vand.u32 %v29, 4294901760
    %v721 = vsub.f32 %v29, %v720
    %722 = vmatpush.msra.mxu0 %v721
    %v723 = vand.u32 %v28, 4294901760
    %v724 = vsub.f32 %v28, %v723
    %725 = vmatpush.msra.mxu0 %v724
    %v726 = vand.u32 %v27, 4294901760
    %v727 = vsub.f32 %v27, %v726
    %728 = vmatpush.msra.mxu0 %v727
    %v729 = vand.u32 %v26, 4294901760
    %v730 = vsub.f32 %v26, %v729
    %731 = vmatpush.msra.mxu0 %v730
    %v732 = vand.u32 %v25, 4294901760
    %v733 = vsub.f32 %v25, %v732
    %734 = vmatpush.msra.mxu0 %v733
    %v735 = vand.u32 %v24, 4294901760
    %v736 = vsub.f32 %v24, %v735
    %737 = vmatpush.msra.mxu0 %v736
    %v738 = vand.u32 %v547, 4294901760
    %v739 = vsub.f32 %v547, %v738
    %740 = vmatmul.f32.gmra.mxu0 %v739
    %v741 = vpop.f32.mrf.mxu0
    %v742 = vadd.f32 %v688, %v741
    %743 = vdwg.mxu0
    %v744 = vand.u32 %v39, 4294901760
    %745 = vmatpush.msra.mxu0 %v744
    %v746 = vand.u32 %v38, 4294901760
    %747 = vmatpush.msra.mxu0 %v746
    %v748 = vand.u32 %v37, 4294901760
    %749 = vmatpush.msra.mxu0 %v748
    %v750 = vand.u32 %v36, 4294901760
    %751 = vmatpush.msra.mxu0 %v750
    %v752 = vand.u32 %v35, 4294901760
    %753 = vmatpush.msra.mxu0 %v752
    %v754 = vand.u32 %v34, 4294901760
    %755 = vmatpush.msra.mxu0 %v754
    %v756 = vand.u32 %v33, 4294901760
    %757 = vmatpush.msra.mxu0 %v756
    %v758 = vand.u32 %v32, 4294901760
    %759 = vmatpush.msra.mxu0 %v758
    %v760 = vand.u32 %v31, 4294901760
    %761 = vmatpush.msra.mxu0 %v760
    %v762 = vand.u32 %v30, 4294901760
    %763 = vmatpush.msra.mxu0 %v762
    %v764 = vand.u32 %v29, 4294901760
    %765 = vmatpush.msra.mxu0 %v764
    %v766 = vand.u32 %v28, 4294901760
    %767 = vmatpush.msra.mxu0 %v766
    %v768 = vand.u32 %v27, 4294901760
    %769 = vmatpush.msra.mxu0 %v768
    %v770 = vand.u32 %v26, 4294901760
    %771 = vmatpush.msra.mxu0 %v770
    %v772 = vand.u32 %v25, 4294901760
    %773 = vmatpush.msra.mxu0 %v772
    %v774 = vand.u32 %v24, 4294901760
    %775 = vmatpush.msra.mxu0 %v774
    %v776 = vand.u32 %v547, 4294901760
    %v777 = vsub.f32 %v547, %v776
    %v778 = vand.u32 %v777, 4294901760
    %779 = vmatmul.f32.gmra.mxu0 %v778
    %v780 = vpop.f32.mrf.mxu0
    %v781 = vadd.f32 %v742, %v780
    %782 = vdwg.mxu0
    %v783 = vand.u32 %v39, 4294901760
    %v784 = vsub.f32 %v39, %v783
    %v785 = vand.u32 %v784, 4294901760
    %786 = vmatpush.msra.mxu0 %v785
    %v787 = vand.u32 %v38, 4294901760
    %v788 = vsub.f32 %v38, %v787
    %v789 = vand.u32 %v788, 4294901760
    %790 = vmatpush.msra.mxu0 %v789
    %v791 = vand.u32 %v37, 4294901760
    %v792 = vsub.f32 %v37, %v791
    %v793 = vand.u32 %v792, 4294901760
    %794 = vmatpush.msra.mxu0 %v793
    %v795 = vand.u32 %v36, 4294901760
    %v796 = vsub.f32 %v36, %v795
    %v797 = vand.u32 %v796, 4294901760
    %798 = vmatpush.msra.mxu0 %v797
    %v799 = vand.u32 %v35, 4294901760
    %v800 = vsub.f32 %v35, %v799
    %v801 = vand.u32 %v800, 4294901760
    %802 = vmatpush.msra.mxu0 %v801
    %v803 = vand.u32 %v34, 4294901760
    %v804 = vsub.f32 %v34, %v803
    %v805 = vand.u32 %v804, 4294901760
    %806 = vmatpush.msra.mxu0 %v805
    %v807 = vand.u32 %v33, 4294901760
    %v808 = vsub.f32 %v33, %v807
    %v809 = vand.u32 %v808, 4294901760
    %810 = vmatpush.msra.mxu0 %v809
    %v811 = vand.u32 %v32, 4294901760
    %v812 = vsub.f32 %v32, %v811
    %v813 = vand.u32 %v812, 4294901760
    %814 = vmatpush.msra.mxu0 %v813
    %v815 = vand.u32 %v31, 4294901760
    %v816 = vsub.f32 %v31, %v815
    %v817 = vand.u32 %v816, 4294901760
    %818 = vmatpush.msra.mxu0 %v817
    %v819 = vand.u32 %v30, 4294901760
    %v820 = vsub.f32 %v30, %v819
    %v821 = vand.u32 %v820, 4294901760
    %822 = vmatpush.msra.mxu0 %v821
    %v823 = vand.u32 %v29, 4294901760
    %v824 = vsub.f32 %v29, %v823
    %v825 = vand.u32 %v824, 4294901760
    %826 = vmatpush.msra.mxu0 %v825
    %v827 = vand.u32 %v28, 4294901760
    %v828 = vsub.f32 %v28, %v827
    %v829 = vand.u32 %v828, 4294901760
    %830 = vmatpush.msra.mxu0 %v829
    %v831 = vand.u32 %v27, 4294901760
    %v832 = vsub.f32 %v27, %v831
    %v833 = vand.u32 %v832, 4294901760
    %834 = vmatpush.msra.mxu0 %v833
    %v835 = vand.u32 %v26, 4294901760
    %v836 = vsub.f32 %v26, %v835
    %v837 = vand.u32 %v836, 4294901760
    %838 = vmatpush.msra.mxu0 %v837
    %v839 = vand.u32 %v25, 4294901760
    %v840 = vsub.f32 %v25, %v839
    %v841 = vand.u32 %v840, 4294901760
    %842 = vmatpush.msra.mxu0 %v841
    %v843 = vand.u32 %v24, 4294901760
    %v844 = vsub.f32 %v24, %v843
    %v845 = vand.u32 %v844, 4294901760
    %846 = vmatpush.msra.mxu0 %v845
    %v847 = vand.u32 %v547, 4294901760
    %848 = vmatmul.f32.gmra.mxu0 %v847
    %v849 = vpop.f32.mrf.mxu0
    %v850 = vadd.f32 %v781, %v849
    %851 = vdwg.mxu0
    %v852 = vand.u32 %v39, 4294901760
    %853 = vmatpush.msra.mxu0 %v852
    %v854 = vand.u32 %v38, 4294901760
    %855 = vmatpush.msra.mxu0 %v854
    %v856 = vand.u32 %v37, 4294901760
    %857 = vmatpush.msra.mxu0 %v856
    %v858 = vand.u32 %v36, 4294901760
    %859 = vmatpush.msra.mxu0 %v858
    %v860 = vand.u32 %v35, 4294901760
    %861 = vmatpush.msra.mxu0 %v860
    %v862 = vand.u32 %v34, 4294901760
    %863 = vmatpush.msra.mxu0 %v862
    %v864 = vand.u32 %v33, 4294901760
    %865 = vmatpush.msra.mxu0 %v864
    %v866 = vand.u32 %v32, 4294901760
    %867 = vmatpush.msra.mxu0 %v866
    %v868 = vand.u32 %v31, 4294901760
    %869 = vmatpush.msra.mxu0 %v868
    %v870 = vand.u32 %v30, 4294901760
    %871 = vmatpush.msra.mxu0 %v870
    %v872 = vand.u32 %v29, 4294901760
    %873 = vmatpush.msra.mxu0 %v872
    %v874 = vand.u32 %v28, 4294901760
    %875 = vmatpush.msra.mxu0 %v874
    %v876 = vand.u32 %v27, 4294901760
    %877 = vmatpush.msra.mxu0 %v876
    %v878 = vand.u32 %v26, 4294901760
    %879 = vmatpush.msra.mxu0 %v878
    %v880 = vand.u32 %v25, 4294901760
    %881 = vmatpush.msra.mxu0 %v880
    %v882 = vand.u32 %v24, 4294901760
    %883 = vmatpush.msra.mxu0 %v882
    %v884 = vand.u32 %v547, 4294901760
    %885 = vmatmul.f32.gmra.mxu0 %v884
    %v886 = vpop.f32.mrf.mxu0
    %v887 = vadd.f32 %v850, %v886
    %888 = vdwg.mxu0
    %v889 = vrsqrt.pop %v887
    %v890 = vmul.f32 %v889, %v887
    %v891 = vmul.f32 %v890, %v889
    %v892 = vmul.f32 0.5, %v891
    %v893 = vsub.f32 1.5, %v892
    %v894 = vmul.f32 %v889, %v893
    %vm895 = vweird.f32 %v887
    %vm896 = vweird.f32 %v889
    %vm897 = vmor %vm895, %vm896
    %v898 = vsel %vm897, %v889, %v894
    %v900 = vsel %vm383, %v898, 0
    %902 = vmatpush.msra.mxu0 0.0
    %903 = vmatpush.msra.mxu0 0.0
    %904 = vmatpush.msra.mxu0 0.0
    %905 = vmatpush.msra.mxu0 0.0
    %906 = vmatpush.msra.mxu0 0.0
    %907 = vmatpush.msra.mxu0 0.0
    %908 = vmatpush.msra.mxu0 0.0
    %909 = vmatpush.msra.mxu0 0.0
    %910 = vmatpush.msra.mxu0 0.0
    %911 = vmatpush.msra.mxu0 0.0
    %912 = vmatpush.msra.mxu0 0.0
    %913 = vmatpush.msra.mxu0 0.0
    %914 = vmatpush.msra.mxu0 0.0
    %915 = vmatpush.msra.mxu0 0.0
    %v916 = vand.u32 %v41, 4294901760
    %917 = vmatpush.msra.mxu0 %v916
    %v918 = vand.u32 %v40, 4294901760
    %919 = vmatpush.msra.mxu0 %v918
    %v920 = vand.u32 %v900, 4294901760
    %v921 = vsub.f32 %v900, %v920
    %v922 = vand.u32 %v921, 4294901760
    %v923 = vsub.f32 %v921, %v922
    %v924 = vand.u32 %v923, 4294901760
    %925 = vmatmul.f32.gmra.mxu0 %v924
    %v926 = vpop.f32.mrf.mxu0
    %v927 = vadd.f32 0.0, %v926
    %928 = vdwg.mxu0
    %929 = vmatpush.msra.mxu0 0.0
    %930 = vmatpush.msra.mxu0 0.0
    %931 = vmatpush.msra.mxu0 0.0
    %932 = vmatpush.msra.mxu0 0.0
    %933 = vmatpush.msra.mxu0 0.0
    %934 = vmatpush.msra.mxu0 0.0
    %935 = vmatpush.msra.mxu0 0.0
    %936 = vmatpush.msra.mxu0 0.0
    %937 = vmatpush.msra.mxu0 0.0
    %938 = vmatpush.msra.mxu0 0.0
    %939 = vmatpush.msra.mxu0 0.0
    %940 = vmatpush.msra.mxu0 0.0
    %941 = vmatpush.msra.mxu0 0.0
    %942 = vmatpush.msra.mxu0 0.0
    %v943 = vand.u32 %v41, 4294901760
    %v944 = vsub.f32 %v41, %v943
    %v945 = vand.u32 %v944, 4294901760
    %v946 = vsub.f32 %v944, %v945
    %v947 = vand.u32 %v946, 4294901760
    %948 = vmatpush.msra.mxu0 %v947
    %v949 = vand.u32 %v40, 4294901760
    %v950 = vsub.f32 %v40, %v949
    %v951 = vand.u32 %v950, 4294901760
    %v952 = vsub.f32 %v950, %v951
    %v953 = vand.u32 %v952, 4294901760
    %954 = vmatpush.msra.mxu0 %v953
    %v955 = vand.u32 %v900, 4294901760
    %956 = vmatmul.f32.gmra.mxu0 %v955
    %v957 = vpop.f32.mrf.mxu0
    %v958 = vadd.f32 %v927, %v957
    %959 = vdwg.mxu0
    %960 = vmatpush.msra.mxu0 0.0
    %961 = vmatpush.msra.mxu0 0.0
    %962 = vmatpush.msra.mxu0 0.0
    %963 = vmatpush.msra.mxu0 0.0
    %964 = vmatpush.msra.mxu0 0.0
    %965 = vmatpush.msra.mxu0 0.0
    %966 = vmatpush.msra.mxu0 0.0
    %967 = vmatpush.msra.mxu0 0.0
    %968 = vmatpush.msra.mxu0 0.0
    %969 = vmatpush.msra.mxu0 0.0
    %970 = vmatpush.msra.mxu0 0.0
    %971 = vmatpush.msra.mxu0 0.0
    %972 = vmatpush.msra.mxu0 0.0
    %973 = vmatpush.msra.mxu0 0.0
    %v974 = vand.u32 %v41, 4294901760
    %v975 = vsub.f32 %v41, %v974
    %976 = vmatpush.msra.mxu0 %v975
    %v977 = vand.u32 %v40, 4294901760
    %v978 = vsub.f32 %v40, %v977
    %979 = vmatpush.msra.mxu0 %v978
    %v980 = vand.u32 %v900, 4294901760
    %v981 = vsub.f32 %v900, %v980
    %982 = vmatmul.f32.gmra.mxu0 %v981
    %v983 = vpop.f32.mrf.mxu0
    %v984 = vadd.f32 %v958, %v983
    %985 = vdwg.mxu0
    %986 = vmatpush.msra.mxu0 0.0
    %987 = vmatpush.msra.mxu0 0.0
    %988 = vmatpush.msra.mxu0 0.0
    %989 = vmatpush.msra.mxu0 0.0
    %990 = vmatpush.msra.mxu0 0.0
    %991 = vmatpush.msra.mxu0 0.0
    %992 = vmatpush.msra.mxu0 0.0
    %993 = vmatpush.msra.mxu0 0.0
    %994 = vmatpush.msra.mxu0 0.0
    %995 = vmatpush.msra.mxu0 0.0
    %996 = vmatpush.msra.mxu0 0.0
    %997 = vmatpush.msra.mxu0 0.0
    %998 = vmatpush.msra.mxu0 0.0
    %999 = vmatpush.msra.mxu0 0.0
    %v1000 = vand.u32 %v41, 4294901760
    %1001 = vmatpush.msra.mxu0 %v1000
    %v1002 = vand.u32 %v40, 4294901760
    %1003 = vmatpush.msra.mxu0 %v1002
    %v1004 = vand.u32 %v900, 4294901760
    %v1005 = vsub.f32 %v900, %v1004
    %v1006 = vand.u32 %v1005, 4294901760
    %1007 = vmatmul.f32.gmra.mxu0 %v1006
    %v1008 = vpop.f32.mrf.mxu0
    %v1009 = vadd.f32 %v984, %v1008
    %1010 = vdwg.mxu0
    %1011 = vmatpush.msra.mxu0 0.0
    %1012 = vmatpush.msra.mxu0 0.0
    %1013 = vmatpush.msra.mxu0 0.0
    %1014 = vmatpush.msra.mxu0 0.0
    %1015 = vmatpush.msra.mxu0 0.0
    %1016 = vmatpush.msra.mxu0 0.0
    %1017 = vmatpush.msra.mxu0 0.0
    %1018 = vmatpush.msra.mxu0 0.0
    %1019 = vmatpush.msra.mxu0 0.0
    %1020 = vmatpush.msra.mxu0 0.0
    %1021 = vmatpush.msra.mxu0 0.0
    %1022 = vmatpush.msra.mxu0 0.0
    %1023 = vmatpush.msra.mxu0 0.0
    %1024 = vmatpush.msra.mxu0 0.0
    %v1025 = vand.u32 %v41, 4294901760
    %v1026 = vsub.f32 %v41, %v1025
    %v1027 = vand.u32 %v1026, 4294901760
    %1028 = vmatpush.msra.mxu0 %v1027
    %v1029 = vand.u32 %v40, 4294901760
    %v1030 = vsub.f32 %v40, %v1029
    %v1031 = vand.u32 %v1030, 4294901760
    %1032 = vmatpush.msra.mxu0 %v1031
    %v1033 = vand.u32 %v900, 4294901760
    %1034 = vmatmul.f32.gmra.mxu0 %v1033
    %v1035 = vpop.f32.mrf.mxu0
    %v1036 = vadd.f32 %v1009, %v1035
    %1037 = vdwg.mxu0
    %1038 = vmatpush.msra.mxu0 0.0
    %1039 = vmatpush.msra.mxu0 0.0
    %1040 = vmatpush.msra.mxu0 0.0
    %1041 = vmatpush.msra.mxu0 0.0
    %1042 = vmatpush.msra.mxu0 0.0
    %1043 = vmatpush.msra.mxu0 0.0
    %1044 = vmatpush.msra.mxu0 0.0
    %1045 = vmatpush.msra.mxu0 0.0
    %1046 = vmatpush.msra.mxu0 0.0
    %1047 = vmatpush.msra.mxu0 0.0
    %1048 = vmatpush.msra.mxu0 0.0
    %1049 = vmatpush.msra.mxu0 0.0
    %1050 = vmatpush.msra.mxu0 0.0
    %1051 = vmatpush.msra.mxu0 0.0
    %v1052 = vand.u32 %v41, 4294901760
    %1053 = vmatpush.msra.mxu0 %v1052
    %v1054 = vand.u32 %v40, 4294901760
    %1055 = vmatpush.msra.mxu0 %v1054
    %v1056 = vand.u32 %v900, 4294901760
    %1057 = vmatmul.f32.gmra.mxu0 %v1056
    %v1058 = vpop.f32.mrf.mxu0
    %v1059 = vadd.f32 %v1036, %v1058
    %1060 = vdwg.mxu0
    %v1061 = vmul.f32 %v546, %v1059
    %v1063 = vperm.slane %v22, 0
    %v1065 = vmul.f32 %v1061, %v1063
    %v1067 = vperm.slane %v23, 0
    %v1069 = vadd.f32 %v1065, %v1067
    %1070 = vst [vmem:[#allocation2] sm:$0xff] %v1069
    // Predicated region
    $region22: #{tpu_custom_call.1} parent=1 // pred_check
      _
    $region23: #{tpu_custom_call.1} parent=1 // pred_check_branch
      %1072 = sbr.rel (0) target = $region25
    $region24: #{tpu_custom_call.1} parent=1 // pred_region
      %1074 = vsyncadd [#allocation3], 0
      %s1076 = sshll.u32 [#allocation2], 4
      %s1077 = int_to_ptr.vmem [resolvable:$true] %s1076
      %s1078 = sshll.u32 %s5, 4
      %s1079 = int_to_ptr.hbm [resolvable:$true] %s1078
      %1081 = dma.vmem_to_hbm [thread:$0]  %s1077, 128, %s1079, [#allocation3]
    $region25: #{tpu_custom_call.1} parent=1 // pred_fallthru
      _
    // Predicated region
    $region26: #{tpu_custom_call.1} parent=1 // pred_check
      _
    $region27: #{tpu_custom_call.1} parent=1 // pred_check_branch
      %1083 = sbr.rel (0) target = $region29
    $region28: #{tpu_custom_call.1} parent=1 // pred_region
      %1085 = dma.done [#allocation3], 128
    $region29: #{tpu_custom_call.1} parent=1 // pred_fallthru
      _
    %1086 = vsyncpa [#allocation3], 1

</llo_original>
